<compile_context>
chip_gen: v7x
topology: tpu7x:2x2x1
jax: 0.10.0
libtpu: 0.0.40
codegen_flags: <defaults>
</compile_context>

<pallas_src>
import jax
import jax.numpy as jnp
from jax.experimental import pallas as pl
from jax.experimental.pallas import tpu as pltpu

HIDDEN = 64        # logical hidden width of the torch module
HID_PAD = 128      # lane-dense padded hidden width (weights/bias zero padded)
OUT_PAD = 128      # lane-dense padded classifier width
A_QUANT_SCALE = 127.0          # a_hat entries lie in [0, 1]
A_DEQUANT = 1.0 / A_QUANT_SCALE
_VMEM_LIMIT = 32 * 1024 * 1024  # scoped-VMEM budget (safe on v5e/v6e/v7x)


def _round_up(n, m):
    return ((n + m - 1) // m) * m


def _pad_nodes(num_nodes):
    n = max(int(num_nodes), 1)
    if n <= 1024:
        return _round_up(n, 256)
    return _round_up(n, 1024)


def _choose_tiles(n_pad):
    """Large (row, reduction) tiles to amortize the ~0.35us/step pipeline
    overhead; tm capped at n_pad//2 so grid[0] >= 2 (v7x megacore)."""
    tk = next(t for t in (1024, 512, 256, 128) if n_pad % t == 0)
    tm_cap = max(n_pad // 2, 128)
    tm = next(t for t in (2048, 1024, 512, 256, 128)
              if t <= tm_cap and n_pad % t == 0)
    return tm, tk


# ---------------------------------------------------------------------------
# Kernel 1: layer 1 + projection for layer 2
#   Z2 = relu( A_hat @ (X @ W1) + b1 ) @ W2      (bf16 out, f32 accumulation)
#   grid = (n_pad // tm, n_pad // tk); k (reduction) last, row axis parallel.
# ---------------------------------------------------------------------------
def _layer1_kernel(a_ref, x_ref, w1_ref, b1_ref, w2_ref, z_ref, acc_ref):
    @pl.when(pl.program_id(1) == 0)
    def _():
        acc_ref[...] = jnp.zeros_like(acc_ref)

    # X @ W1 recompute per step is negligible (f_in << tm) and avoids an extra
    # N x HID_PAD round trip.
    xw = jnp.dot(x_ref[...], w1_ref[...], preferred_element_type=jnp.float32)
    # int8 adjacency tile -> bf16 MXU operand (dequant scale folded at finalize)
    a = a_ref[...].astype(jnp.float32).astype(jnp.bfloat16)
    acc_ref[...] += jnp.dot(a, xw.astype(jnp.bfloat16),
                            preferred_element_type=jnp.float32)

    @pl.when(pl.program_id(1) == pl.num_programs(1) - 1)
    def _():
        h1 = jnp.maximum(acc_ref[...] * A_DEQUANT + b1_ref[...], 0.0)
        # Emit Z2 = H1 @ W2 so layer 2's body is a single A @ Z matmul.
        z_ref[...] = jnp.dot(h1.astype(jnp.bfloat16), w2_ref[...],
                             preferred_element_type=jnp.float32
                             ).astype(z_ref.dtype)


def _gcn_layer1(a_q, x, w1, b1, w2):
    n_pad = a_q.shape[0]
    f_in = x.shape[1]
    tm, tk = _choose_tiles(n_pad)
    grid = (n_pad // tm, n_pad // tk)

    flops = (2 * n_pad * n_pad * HID_PAD
             + grid[0] * 2 * n_pad * f_in * HID_PAD
             + 2 * n_pad * HID_PAD * HID_PAD)
    bytes_accessed = (a_q.size                         # int8 adjacency stream
                      + grid[0] * x.size * 2           # X re-read per row tile
                      + n_pad * HID_PAD * 2            # Z2 output
                      + w1.size * 2 + w2.size * 2 + b1.size * 4)

    return pl.pallas_call(
        _layer1_kernel,
        out_shape=jax.ShapeDtypeStruct((n_pad, HID_PAD), jnp.bfloat16),
        grid=grid,
        in_specs=[
            pl.BlockSpec((tm, tk), lambda i, k: (i, k)),            # A (int8)
            pl.BlockSpec((tk, f_in), lambda i, k: (k, 0)),          # X
            pl.BlockSpec((f_in, HID_PAD), lambda i, k: (0, 0)),     # W1
            pl.BlockSpec((1, HID_PAD), lambda i, k: (0, 0)),        # b1
            pl.BlockSpec((HID_PAD, HID_PAD), lambda i, k: (0, 0)),  # W2
        ],
        out_specs=pl.BlockSpec((tm, HID_PAD), lambda i, k: (i, 0)),
        scratch_shapes=[pltpu.VMEM((tm, HID_PAD), jnp.float32)],
        compiler_params=pltpu.CompilerParams(
            dimension_semantics=("parallel", "arbitrary"),
            vmem_limit_bytes=_VMEM_LIMIT),
        cost_estimate=pl.CostEstimate(flops=flops, transcendentals=0,
                                      bytes_accessed=bytes_accessed),
    )(a_q, x, w1, b1, w2)


# ---------------------------------------------------------------------------
# Kernel 2: layer 2 fused with global_mean_pool + fc
#   H2_tile = relu( A_hat @ Z2 + b2 ) ; pooled += P[:, i] @ H2_tile
#   out = pooled @ Wf + bf   (emitted at the last (i, k) grid step)
# ---------------------------------------------------------------------------
def _layer2_pool_fc_kernel(a_ref, z_ref, b2_ref, p_ref, wf_ref, bf_ref,
                           o_ref, acc_ref, pooled_ref):
    i = pl.program_id(0)
    k = pl.program_id(1)

    @pl.when((i == 0) & (k == 0))
    def _():
        pooled_ref[...] = jnp.zeros_like(pooled_ref)

    @pl.when(k == 0)
    def _():
        acc_ref[...] = jnp.zeros_like(acc_ref)

    a = a_ref[...].astype(jnp.float32).astype(jnp.bfloat16)
    acc_ref[...] += jnp.dot(a, z_ref[...], preferred_element_type=jnp.float32)

    last_k = k == pl.num_programs(1) - 1

    @pl.when(last_k)
    def _():
        h2 = jnp.maximum(acc_ref[...] * A_DEQUANT + b2_ref[...], 0.0)
        pooled_ref[...] += jnp.dot(p_ref[...], h2.astype(jnp.bfloat16),
                                   preferred_element_type=jnp.float32)

    @pl.when(last_k & (i == pl.num_programs(0) - 1))
    def _():
        # dropout(p=0.5, training=False) is the identity (inference).
        o_ref[...] = (jnp.dot(pooled_ref[...], wf_ref[...],
                              preferred_element_type=jnp.float32)
                      + bf_ref[...])


def _gcn_layer2_pool_fc(a_q, z, b2, pool, wf, bf):
    n_pad = a_q.shape[0]
    g_pad = pool.shape[0]
    tm, tk = _choose_tiles(n_pad)
    grid = (n_pad // tm, n_pad // tk)

    flops = (2 * n_pad * n_pad * HID_PAD
             + 2 * g_pad * n_pad * HID_PAD
             + 2 * g_pad * HID_PAD * OUT_PAD)
    bytes_accessed = (a_q.size + z.size * 2 + pool.size * 2
                      + wf.size * 4 + b2.size * 4 + g_pad * OUT_PAD * 4)

    return pl.pallas_call(
        _layer2_pool_fc_kernel,
        out_shape=jax.ShapeDtypeStruct((g_pad, OUT_PAD), jnp.float32),
        grid=grid,
        in_specs=[
            pl.BlockSpec((tm, tk), lambda i, k: (i, k)),            # A (int8)
            pl.BlockSpec((tk, HID_PAD), lambda i, k: (k, 0)),       # Z2
            pl.BlockSpec((1, HID_PAD), lambda i, k: (0, 0)),        # b2
            pl.BlockSpec((g_pad, tm), lambda i, k: (0, i)),         # pool matrix
            pl.BlockSpec((HID_PAD, OUT_PAD), lambda i, k: (0, 0)),  # Wf
            pl.BlockSpec((1, OUT_PAD), lambda i, k: (0, 0)),        # bf
        ],
        out_specs=pl.BlockSpec((g_pad, OUT_PAD), lambda i, k: (0, 0)),
        scratch_shapes=[pltpu.VMEM((tm, HID_PAD), jnp.float32),
                        pltpu.VMEM((g_pad, HID_PAD), jnp.float32)],
        compiler_params=pltpu.CompilerParams(
            # pooled accumulates across the row axis too -> both "arbitrary".
            # TODO(synk): on v7x, emit per-core partial pooled outputs (combined
            # in the wrapper) to recover megacore parallelism on this kernel.
            dimension_semantics=("arbitrary", "arbitrary"),
            vmem_limit_bytes=_VMEM_LIMIT),
        cost_estimate=pl.CostEstimate(flops=flops, transcendentals=0,
                                      bytes_accessed=bytes_accessed),
    )(a_q, z, b2, pool, wf, bf)


# ---------------------------------------------------------------------------
# Kernel 3: no-edge branch  relu(X @ Wne + bne) -> mean pool -> fc
# ---------------------------------------------------------------------------
def _no_edge_kernel(x_ref, w_ref, b_ref, p_ref, wf_ref, bf_ref, o_ref, acc_ref):
    @pl.when(pl.program_id(0) == 0)
    def _():
        acc_ref[...] = jnp.zeros_like(acc_ref)

    h = jnp.dot(x_ref[...], w_ref[...], preferred_element_type=jnp.float32)
    h = jnp.maximum(h + b_ref[...], 0.0)
    acc_ref[...] += jnp.dot(p_ref[...], h.astype(jnp.bfloat16),
                            preferred_element_type=jnp.float32)

    @pl.when(pl.program_id(0) == pl.num_programs(0) - 1)
    def _():
        o_ref[...] = (jnp.dot(acc_ref[...], wf_ref[...],
                              preferred_element_type=jnp.float32) + bf_ref[...])


def _no_edge(x, w, b, pool, wf, bf):
    g_pad, n_pad = pool.shape
    f_in = x.shape[1]
    _, tk = _choose_tiles(n_pad)
    grid = (n_pad // tk,)

    flops = (2 * n_pad * f_in * HID_PAD + 2 * g_pad * n_pad * HID_PAD
             + 2 * g_pad * HID_PAD * OUT_PAD)
    bytes_accessed = (x.size * 2 + pool.size * 2 + w.size * 2 + wf.size * 4
                      + g_pad * OUT_PAD * 4)

    return pl.pallas_call(
        _no_edge_kernel,
        out_shape=jax.ShapeDtypeStruct((g_pad, OUT_PAD), jnp.float32),
        grid=grid,
        in_specs=[
            pl.BlockSpec((tk, f_in), lambda k: (k, 0)),           # X
            pl.BlockSpec((f_in, HID_PAD), lambda k: (0, 0)),      # Wne
            pl.BlockSpec((1, HID_PAD), lambda k: (0, 0)),         # bne
            pl.BlockSpec((g_pad, tk), lambda k: (0, k)),          # pool matrix
            pl.BlockSpec((HID_PAD, OUT_PAD), lambda k: (0, 0)),   # Wf
            pl.BlockSpec((1, OUT_PAD), lambda k: (0, 0)),         # bf
        ],
        out_specs=pl.BlockSpec((g_pad, OUT_PAD), lambda k: (0, 0)),
        scratch_shapes=[pltpu.VMEM((g_pad, HID_PAD), jnp.float32)],
        compiler_params=pltpu.CompilerParams(
            dimension_semantics=("arbitrary",),
            vmem_limit_bytes=_VMEM_LIMIT),
        cost_estimate=pl.CostEstimate(flops=flops, transcendentals=0,
                                      bytes_accessed=bytes_accessed),
    )(x, w, b, pool, wf, bf)


# ---------------------------------------------------------------------------
# Wrapper-side graph preprocessing
# ---------------------------------------------------------------------------
def build_normalized_adjacency_int8(edge_index, num_nodes, n_pad):
    """Dense PyG-style gcn_norm adjacency with self loops, zero-padded and
    symmetrically quantized to int8 (entries lie in [0, 1]); dequantized inside
    the kernels via the fixed A_DEQUANT scale folded into the finalize.
    TODO(synk): for large sparse commit graphs replace the dense N x N matrix
    with CSR + scalar-prefetch gather, and/or keep the int8 A resident in VMEM
    across both layers when n_pad**2 bytes fit the scoped budget."""
    row = edge_index[0]
    col = edge_index[1]
    loops = jnp.arange(num_nodes)
    row = jnp.concatenate([row, loops])
    col = jnp.concatenate([col, loops])
    deg = jnp.zeros((num_nodes,), jnp.float32).at[col].add(1.0)
    dis = jax.lax.rsqrt(jnp.maximum(deg, 1.0))   # deg >= 1 (self-loops)
    norm = dis[row] * dis[col]
    # aggregation is target <- source:  a_hat[target, source] = norm
    # scatter directly into bf16 (no f32 N x N intermediate), quantize once.
    a_bf = jnp.zeros((n_pad, n_pad), jnp.bfloat16).at[col, row].add(
        norm.astype(jnp.bfloat16))
    a_q = jnp.clip(jnp.round(a_bf.astype(jnp.float32) * A_QUANT_SCALE),
                   -127.0, 127.0).astype(jnp.int8)
    return a_q


def build_pool_matrix(batch, num_graphs, n_pad, g_pad):
    """[g_pad, n_pad] matrix implementing global_mean_pool (zero-padded, bf16).
    Assumes num_graphs == max(batch) + 1 (nodes with batch id >= num_graphs
    would be dropped)."""
    num_nodes = batch.shape[0]
    onehot = (jnp.arange(g_pad)[:, None] == batch[None, :]).astype(jnp.float32)
    counts = jnp.maximum(onehot.sum(axis=1, keepdims=True), 1.0)
    pool = onehot / counts
    pool = jnp.pad(pool, ((0, 0), (0, n_pad - num_nodes)))
    return pool.astype(jnp.bfloat16)


def _pad2(a, shape):
    out = jnp.zeros(shape, jnp.float32)
    return out.at[: a.shape[0], : a.shape[1]].set(a)


def init_params(key, num_node_features, num_classes):
    ks = jax.random.split(key, 8)
    s = 0.1

    def rnd(k, shape):
        return s * jax.random.normal(k, shape, jnp.float32)

    conv1_w = _pad2(rnd(ks[0], (num_node_features, HIDDEN)), (num_node_features, HID_PAD))
    conv1_b = _pad2(rnd(ks[1], (1, HIDDEN)), (1, HID_PAD))
    conv2_w = _pad2(rnd(ks[2], (HIDDEN, HIDDEN)), (HID_PAD, HID_PAD))
    conv2_b = _pad2(rnd(ks[3], (1, HIDDEN)), (1, HID_PAD))
    fc_w = _pad2(rnd(ks[4], (HIDDEN, num_classes)), (HID_PAD, OUT_PAD))
    fc_b = _pad2(rnd(ks[5], (1, num_classes)), (1, OUT_PAD))
    ne_w = _pad2(rnd(ks[6], (num_node_features, HIDDEN)), (num_node_features, HID_PAD))
    ne_b = _pad2(rnd(ks[7], (1, HIDDEN)), (1, HID_PAD))
    return {
        "conv1_w": conv1_w.astype(jnp.bfloat16), "conv1_b": conv1_b,
        "conv2_w": conv2_w.astype(jnp.bfloat16), "conv2_b": conv2_b,
        "fc_w": fc_w, "fc_b": fc_b,
        "no_edge_w": ne_w.astype(jnp.bfloat16), "no_edge_b": ne_b,
    }


def commit_gcn_forward(params, x, edge_index, batch, num_graphs, num_classes):
    num_nodes = x.shape[0]
    n_pad = _pad_nodes(num_nodes)
    g_pad = _round_up(max(num_graphs, 1), 16)   # bf16 sublane packing

    pool = build_pool_matrix(batch, num_graphs, n_pad, g_pad)
    x_pad = jnp.zeros((n_pad, x.shape[1]), jnp.bfloat16).at[:num_nodes].set(
        x.astype(jnp.bfloat16))

    if edge_index.size == 0:
        # no-edge branch: relu(no_edge_transform(x)) -> mean pool -> fc
        out = _no_edge(x_pad, params["no_edge_w"], params["no_edge_b"],
                       pool, params["fc_w"], params["fc_b"])
    else:
        a_q = build_normalized_adjacency_int8(edge_index, num_nodes, n_pad)
        # layer 1 emits Z2 = relu(A @ (X@W1) + b1) @ W2 (bf16)
        z2 = _gcn_layer1(a_q, x_pad, params["conv1_w"], params["conv1_b"],
                         params["conv2_w"])
        # layer 2 + global_mean_pool + fc fused into one kernel
        out = _gcn_layer2_pool_fc(a_q, z2, params["conv2_b"], pool,
                                  params["fc_w"], params["fc_b"])

    # dropout(p=0.5, training=False) is the identity; slice away padding.
    return out[:num_graphs, :num_classes]


# ---------------------------------------------------------------------------
# Pure-JAX reference (f32) for a correctness sanity check
# ---------------------------------------------------------------------------
def _reference_forward(params, x, edge_index, batch, num_graphs, num_classes):
    num_nodes = x.shape[0]
    if edge_index.size == 0:
        w = params["no_edge_w"][:, :HIDDEN].astype(jnp.float32)
        h = jnp.maximum(x @ w + params["no_edge_b"][0, :HIDDEN], 0.0)
    else:
        row, col = edge_index[0], edge_index[1]
        loops = jnp.arange(num_nodes)
        row = jnp.concatenate([row, loops])
        col = jnp.concatenate([col, loops])
        deg = jnp.zeros((num_nodes,), jnp.float32).at[col].add(1.0)
        dis = 1.0 / jnp.sqrt(deg)
        norm = dis[row] * dis[col]
        a = jnp.zeros((num_nodes, num_nodes), jnp.float32).at[col, row].add(norm)
        w1 = params["conv1_w"][:, :HIDDEN].astype(jnp.float32)
        w2 = params["conv2_w"][:HIDDEN, :HIDDEN].astype(jnp.float32)
        h = jnp.maximum(a @ (x @ w1) + params["conv1_b"][0, :HIDDEN], 0.0)
        h = jnp.maximum(a @ (h @ w2) + params["conv2_b"][0, :HIDDEN], 0.0)
    onehot = (jnp.arange(num_graphs)[:, None] == batch[None, :]).astype(jnp.float32)
    pooled = (onehot @ h) / jnp.maximum(onehot.sum(1, keepdims=True), 1.0)
    return pooled @ params["fc_w"][:HIDDEN, :num_classes] + params["fc_b"][0, :num_classes]


if __name__ == "__main__":
    key = jax.random.PRNGKey(0)
    k_param, k_x = jax.random.split(key)

    num_node_features = 16
    num_classes = 4
    num_nodes = 16          # 2 graphs x 8 nodes
    num_graphs = 2

    params = init_params(k_param, num_node_features, num_classes)

    x = jax.random.normal(k_x, (num_nodes, num_node_features), jnp.float32)
    batch = jnp.concatenate([jnp.zeros((8,), jnp.int32), jnp.ones((8,), jnp.int32)])

    # undirected ring inside each graph (both directions), shape [2, 32]
    src, dst = [], []
    for g in range(num_graphs):
        base = g * 8
        for i in range(8):
            a, b = base + i, base + (i + 1) % 8
            src += [a, b]
            dst += [b, a]
    edge_index = jnp.array([src, dst], dtype=jnp.int32)

    # edge branch (fused layer1->Z2 kernel + fused layer2/pool/fc kernel)
    out = commit_gcn_forward(params, x, edge_index, batch, num_graphs, num_classes)
    out = jax.block_until_ready(out)
    assert out.shape == (num_graphs, num_classes)
    assert jnp.all(jnp.isfinite(out))
    ref = _reference_forward(params, x, edge_index, batch, num_graphs, num_classes)
    # bf16 operands + int8 adjacency quantization -> loose tolerance
    assert jnp.allclose(out, ref, atol=5e-2, rtol=5e-2)

    # no-edge branch (reduced kernel, no N x N matmuls)
    empty_edges = jnp.zeros((2, 0), dtype=jnp.int32)
    out_ne = commit_gcn_forward(params, x, empty_edges, batch, num_graphs, num_classes)
    out_ne = jax.block_until_ready(out_ne)
    assert out_ne.shape == (num_graphs, num_classes)
    assert jnp.all(jnp.isfinite(out_ne))
    ref_ne = _reference_forward(params, x, empty_edges, batch, num_graphs, num_classes)
    assert jnp.allclose(out_ne, ref_ne, atol=5e-2, rtol=5e-2)

    print("KERNEL_OK")
</pallas_src>

<mosaic_0001>
module attributes {stable_mosaic.version = 11 : i64} {
  func.func @_layer1_kernel(%arg0: i32, %arg1: i32, %arg2: memref<128x256xi8, #tpu.memory_space<vmem>>, %arg3: memref<256x16xbf16, #tpu.memory_space<vmem>>, %arg4: memref<16x128xbf16, #tpu.memory_space<vmem>>, %arg5: memref<1x128xf32, #tpu.memory_space<vmem>>, %arg6: memref<128x128xbf16, #tpu.memory_space<vmem>>, %arg7: memref<128x128xbf16, #tpu.memory_space<vmem>>, %arg8: memref<128x128xf32, #tpu.memory_space<vmem>>) attributes {dimension_semantics = [#tpu.dimension_semantics<parallel>, #tpu.dimension_semantics<arbitrary>], iteration_bounds = array<i64: 2, 1>, scalar_prefetch = 0 : i64, scratch_operands = 1 : i64, tpu.core_type = #tpu.core_type<tc>, window_params = [{transform_indices = @transform_0, window_bounds = array<i64: 128, 256>}, {transform_indices = @transform_1, window_bounds = array<i64: 256, 16>}, {pipeline_mode = #tpu.pipeline_mode<synchronous>, transform_indices = @transform_2, window_bounds = array<i64: 16, 128>}, {pipeline_mode = #tpu.pipeline_mode<synchronous>, transform_indices = @transform_3, window_bounds = array<i64: 1, 128>}, {pipeline_mode = #tpu.pipeline_mode<synchronous>, transform_indices = @transform_4, window_bounds = array<i64: 128, 128>}, {transform_indices = @transform_5, window_bounds = array<i64: 128, 128>}]} {
    %c0_i32 = arith.constant 0 : i32
    %0 = arith.cmpi eq, %arg1, %c0_i32 : i32
    %1 = arith.extui %0 : i1 to i32
    %c0_i32_0 = arith.constant 0 : i32
    %2 = arith.cmpi ne, %1, %c0_i32_0 : i32
    scf.if %2 {
      %cst_13 = arith.constant 0.000000e+00 : f32
      %17 = vector.broadcast %cst_13 : f32 to vector<128x128xf32>
      %c0_14 = arith.constant 0 : index
      %c0_15 = arith.constant 0 : index
      %18 = vector.load %arg8[%c0_14, %c0_15] : memref<128x128xf32, #tpu.memory_space<vmem>>, vector<128x128xf32>
      tpu.vector_store %arg8[%c0_14, %c0_15], %17 {strides = array<i32>} : memref<128x128xf32, #tpu.memory_space<vmem>>, vector<128x128xf32>,
    } else {
    }
    %c0 = arith.constant 0 : index
    %c0_1 = arith.constant 0 : index
    %3 = vector.load %arg3[%c0, %c0_1] : memref<256x16xbf16, #tpu.memory_space<vmem>>, vector<256x16xbf16>
    %c0_2 = arith.constant 0 : index
    %c0_3 = arith.constant 0 : index
    %4 = vector.load %arg4[%c0_2, %c0_3] : memref<16x128xbf16, #tpu.memory_space<vmem>>, vector<16x128xbf16>
    %cst = arith.constant dense<0.000000e+00> : vector<256x128xf32>
    %5 = tpu.matmul %3, %4, %cst {dimension_numbers = #tpu.dot_dimension_numbers<[1], [0], [0], [1], [0, 0, 1, 1], [], []>} : vector<256x16xbf16>, vector<16x128xbf16>, vector<256x128xf32> -> vector<256x128xf32>
    %c0_4 = arith.constant 0 : index
    %c0_5 = arith.constant 0 : index
    %6 = vector.load %arg2[%c0_4, %c0_5] : memref<128x256xi8, #tpu.memory_space<vmem>>, vector<128x256xi8>
    %7 = arith.sitofp %6 : vector<128x256xi8> to vector<128x256xf32>
    %8 = arith.truncf %7 : vector<128x256xf32> to vector<128x256xbf16>
    %c0_6 = arith.constant 0 : index
    %c0_7 = arith.constant 0 : index
    %9 = vector.load %arg8[%c0_6, %c0_7] : memref<128x128xf32, #tpu.memory_space<vmem>>, vector<128x128xf32>
    %10 = arith.truncf %5 : vector<256x128xf32> to vector<256x128xbf16>
    %cst_8 = arith.constant dense<0.000000e+00> : vector<128x128xf32>
    %11 = tpu.matmul %8, %10, %cst_8 {dimension_numbers = #tpu.dot_dimension_numbers<[1], [0], [0], [1], [0, 0, 1, 1], [], []>} : vector<128x256xbf16>, vector<256x128xbf16>, vector<128x128xf32> -> vector<128x128xf32>
    %12 = arith.addf %9, %11 : vector<128x128xf32>
    %c0_9 = arith.constant 0 : index
    %c0_10 = arith.constant 0 : index
    %13 = vector.load %arg8[%c0_9, %c0_10] : memref<128x128xf32, #tpu.memory_space<vmem>>, vector<128x128xf32>
    tpu.vector_store %arg8[%c0_9, %c0_10], %12 {strides = array<i32>} : memref<128x128xf32, #tpu.memory_space<vmem>>, vector<128x128xf32>,
    %c0_i32_11 = arith.constant 0 : i32
    %14 = arith.cmpi eq, %arg1, %c0_i32_11 : i32
    %15 = arith.extui %14 : i1 to i32
    %c0_i32_12 = arith.constant 0 : i32
    %16 = arith.cmpi ne, %15, %c0_i32_12 : i32
    scf.if %16 {
      %c0_13 = arith.constant 0 : index
      %c0_14 = arith.constant 0 : index
      %17 = vector.load %arg8[%c0_13, %c0_14] : memref<128x128xf32, #tpu.memory_space<vmem>>, vector<128x128xf32>
      %cst_15 = arith.constant 0.00787401571 : f32
      %18 = vector.broadcast %cst_15 : f32 to vector<128x128xf32>
      %19 = arith.mulf %17, %18 : vector<128x128xf32>
      %c0_16 = arith.constant 0 : index
      %c0_17 = arith.constant 0 : index
      %20 = vector.load %arg5[%c0_16, %c0_17] : memref<1x128xf32, #tpu.memory_space<vmem>>, vector<1x128xf32>
      %21 = vector.broadcast %20 : vector<1x128xf32> to vector<128x128xf32>
      %22 = arith.addf %19, %21 : vector<128x128xf32>
      %cst_18 = arith.constant 0.000000e+00 : f32
      %23 = vector.broadcast %cst_18 : f32 to vector<128x128xf32>
      %24 = arith.maximumf %22, %23 : vector<128x128xf32>
      %25 = arith.truncf %24 : vector<128x128xf32> to vector<128x128xbf16>
      %c0_19 = arith.constant 0 : index
      %c0_20 = arith.constant 0 : index
      %26 = vector.load %arg6[%c0_19, %c0_20] : memref<128x128xbf16, #tpu.memory_space<vmem>>, vector<128x128xbf16>
      %cst_21 = arith.constant dense<0.000000e+00> : vector<128x128xf32>
      %27 = tpu.matmul %25, %26, %cst_21 {dimension_numbers = #tpu.dot_dimension_numbers<[1], [0], [0], [1], [0, 0, 1, 1], [], []>} : vector<128x128xbf16>, vector<128x128xbf16>, vector<128x128xf32> -> vector<128x128xf32>
      %28 = arith.truncf %27 : vector<128x128xf32> to vector<128x128xbf16>
      %c0_22 = arith.constant 0 : index
      %c0_23 = arith.constant 0 : index
      %29 = vector.load %arg7[%c0_22, %c0_23] : memref<128x128xbf16, #tpu.memory_space<vmem>>, vector<128x128xbf16>
      tpu.vector_store %arg7[%c0_22, %c0_23], %28 {strides = array<i32>} : memref<128x128xbf16, #tpu.memory_space<vmem>>, vector<128x128xbf16>,
    } else {
    }
    return
  }
  func.func @transform_0(%arg0: i32, %arg1: i32) -> (i32, i32) {
    %c0_i32 = arith.constant 0 : i32
    return %arg0, %arg1 : i32, i32
  }
  func.func @transform_1(%arg0: i32, %arg1: i32) -> (i32, i32) {
    %c0_i32 = arith.constant 0 : i32
    %c0_i32_0 = arith.constant 0 : i32
    return %arg1, %c0_i32 : i32, i32
  }
  func.func @transform_2(%arg0: i32, %arg1: i32) -> (i32, i32) {
    %c0_i32 = arith.constant 0 : i32
    %c0_i32_0 = arith.constant 0 : i32
    %c0_i32_1 = arith.constant 0 : i32
    return %c0_i32, %c0_i32_0 : i32, i32
  }
  func.func @transform_3(%arg0: i32, %arg1: i32) -> (i32, i32) {
    %c0_i32 = arith.constant 0 : i32
    %c0_i32_0 = arith.constant 0 : i32
    %c0_i32_1 = arith.constant 0 : i32
    return %c0_i32, %c0_i32_0 : i32, i32
  }
  func.func @transform_4(%arg0: i32, %arg1: i32) -> (i32, i32) {
    %c0_i32 = arith.constant 0 : i32
    %c0_i32_0 = arith.constant 0 : i32
    %c0_i32_1 = arith.constant 0 : i32
    return %c0_i32, %c0_i32_0 : i32, i32
  }
  func.func @transform_5(%arg0: i32, %arg1: i32) -> (i32, i32) {
    %c0_i32 = arith.constant 0 : i32
    %c0_i32_0 = arith.constant 0 : i32
    return %arg0, %c0_i32 : i32, i32
  }
}

</mosaic_0001>

<llo_original>
// kernel: tpu_custom_call.1
$region0: #{tpu_custom_call.1}
  #allocation0 [shape = 'u32[]', space=smem, size = 0x4, offset = 0x4, fixed_abs, tag = 'smem constant byte address 0x4 - core index']
  #allocation1 [shape = 'u32[144,128]{1,0:T(1,128)}', space=vmem, size = 0x12000, scoped, tag = 'internal scratch']
  #allocation2 [shape = 'f32[128,128]{1,0:T(8,128)}', space=vmem, size = 0x10000, scoped, tag = 'scratch operand']
  %s0 = inlined_call_operand.vmem [shape: s8[256,256], index: 0, kind: input, shape index: {}]
  %s1 = inlined_call_operand.vmem [shape: bf16[256,16], index: 1, kind: input, shape index: {}]
  %s2 = inlined_call_operand.vmem [shape: bf16[16,128], index: 2, kind: input, shape index: {}]
  %s3 = inlined_call_operand.vmem [shape: f32[1,128], index: 3, kind: input, shape index: {}]
  %s4 = inlined_call_operand.hbm [shape: bf16[128,128], index: 4, kind: input, shape index: {}]
  %s5 = inlined_call_operand.hbm [shape: bf16[256,128], index: 5, kind: output, shape index: {}]
  %s6 = sld [smem:[#allocation0]]
  $region65: #{tpu_custom_call.1} parent=0
    _
  %s8 = ssub.s32 1, %s6
  %s9 = scalar_select 0, %s8, %s6
  $region1: #{tpu_custom_call.1} parent=0
    #allocation3 [shape = 'u8[32768]{0}', space=vmem, size = 0x8000, scoped, tag = 'input window, operand 4, single buffered']
    #allocation4 [shape = 's32[2]{0}', space=sflag, size = 0x8, scoped, tag = 'scoped memory for tpu_custom_call.1']
    #allocation5 [shape = 's32[2]{0}', space=sflag, size = 0x8, scoped, tag = 'scoped memory for tpu_custom_call.1']
    #allocation6 [shape = 'u8[65536]{0}', space=vmem, size = 0x10000, scoped, tag = 'output window, operand 0']
    %10 = vsyncpa [#allocation4], 0
    %11 = vsyncpa [#allocation5], 0
    %s12 = scalar_lea.sflag [#allocation5], 1
    %13 = vsyncpa %s12, 0
    loop: start=0, step=1, limit=4
    $region2: #{tpu_custom_call.1} parent=1 // loop_pre_header
      _
    $region3: #{tpu_custom_call.1} parent=1 // loop_header
      %s15 = sphi 0, %s19
      %p16 = scmp.ge.s32.totalorder %s15, 4
      %s22 = sphi 0, %s34
      %s23 = sphi 0, %s30
      %s24 = sphi 0, %s22
      %s25 = sphi 0, %s23
      %s26 = sphi 0, %s24
      %s27 = sphi 0, %s25
      %s39 = sphi 0, %s41
      %s42 = sphi 0, %s39
      %s43 = sphi 0, %s42
      %s59 = sphi 0, %s43
      %s65 = sphi 0, %s67
      %s68 = sphi 0, %s65
      %s69 = sphi 0, %s68
      %s85 = sphi 0, %s69
      %s89 = sphi 0, %s89
      %s91 = sphi 0, %s89
      %s92 = sphi 0, %s91
      %s106 = sphi 0, %s92
      %s110 = sphi 0, %s110
      %s112 = sphi 0, %s110
      %s113 = sphi 0, %s112
      %s127 = sphi 0, %s113
      %s131 = sphi 0, %s131
      %s133 = sphi 0, %s131
      %s134 = sphi 0, %s133
      %s148 = sphi 0, %s134
      %s154 = sphi 0, %s156
      %s157 = sphi 0, %s154
      %s158 = sphi 0, %s157
      %s174 = sphi 0, %s158
    $region4: #{tpu_custom_call.1} parent=1 // loop_header_branch
      %18 = sbr.rel (%p16) target = $region8
    $region5: #{tpu_custom_call.1} parent=1 // loop_body
      %s20 = ssub.s32 %s15, 1
      %s21 = ssub.s32 %s15, 2
      %s28 = sadd.s32 1, %s23
      %p29 = scmp.ge.s32.totalorder %s28, 1
      %s30 = scalar_select %p29, 0, %s28
      %s31 = sadd.s32 1, %s22
      %s32 = scalar_select %p29, %s31, %s22
      %p33 = scmp.ge.s32.totalorder %s32, 2
      %s34 = scalar_select %p33, 0, %s32
      %s35 = ssub.s32 %s22, %s34
      %s36 = ssub.s32 %s23, %s30
      %s37 = sor.u32 %s35, %s36
      %p38 = scmp.eq.s32.totalorder %s37, 0
      %s40 = sadd.s32 %s39, 1
      %s41 = scalar_select %p38, %s39, %s40
      %p44 = pneg %p38
      %p45 = scmp.eq.s32.totalorder %s15, 1
      %p46 = por %p44, %p45
      %p47 = scmp.ne.s32.totalorder %s39, %s42
      %p48 = scmp.eq.s32.totalorder %s15, 0
      %p49 = por %p47, %p48
      %p50 = scmp.ne.s32.totalorder %s39, %s42
      %p51 = scmp.eq.s32.totalorder %s20, 1
      %p52 = por %p50, %p51
      %p53 = scmp.ne.s32.totalorder %s42, %s43
      %p54 = scmp.eq.s32.totalorder %s20, 0
      %p55 = por %p53, %p54
      %p56 = scmp.ne.s32.totalorder %s42, %s43
      %p57 = scmp.eq.s32.totalorder %s21, 1
      %p58 = por %p56, %p57
      %p60 = scmp.ne.s32.totalorder %s43, %s59
      %p61 = scmp.eq.s32.totalorder %s21, 0
      %p62 = por %p60, %p61
      %s63 = ssub.s32 %s23, %s30
      %p64 = scmp.eq.s32.totalorder %s63, 0
      %s66 = sadd.s32 %s65, 1
      %s67 = scalar_select %p64, %s65, %s66
      %p70 = pneg %p64
      %p71 = scmp.eq.s32.totalorder %s15, 1
      %p72 = por %p70, %p71
      %p73 = scmp.ne.s32.totalorder %s65, %s68
      %p74 = scmp.eq.s32.totalorder %s15, 0
      %p75 = por %p73, %p74
      %p76 = scmp.ne.s32.totalorder %s65, %s68
      %p77 = scmp.eq.s32.totalorder %s20, 1
      %p78 = por %p76, %p77
      %p79 = scmp.ne.s32.totalorder %s68, %s69
      %p80 = scmp.eq.s32.totalorder %s20, 0
      %p81 = por %p79, %p80
      %p82 = scmp.ne.s32.totalorder %s68, %s69
      %p83 = scmp.eq.s32.totalorder %s21, 1
      %p84 = por %p82, %p83
      %p86 = scmp.ne.s32.totalorder %s69, %s85
      %p87 = scmp.eq.s32.totalorder %s21, 0
      %p88 = por %p86, %p87
      %s90 = sadd.s32 %s89, 1
      %p93 = scmp.eq.s32.totalorder %s15, 1
      %p94 = scmp.ne.s32.totalorder %s89, %s91
      %p95 = scmp.eq.s32.totalorder %s15, 0
      %p96 = por %p94, %p95
      %p97 = scmp.ne.s32.totalorder %s89, %s91
      %p98 = scmp.eq.s32.totalorder %s20, 1
      %p99 = por %p97, %p98
      %p100 = scmp.ne.s32.totalorder %s91, %s92
      %p101 = scmp.eq.s32.totalorder %s20, 0
      %p102 = por %p100, %p101
      %p103 = scmp.ne.s32.totalorder %s91, %s92
      %p104 = scmp.eq.s32.totalorder %s21, 1
      %p105 = por %p103, %p104
      %p107 = scmp.ne.s32.totalorder %s92, %s106
      %p108 = scmp.eq.s32.totalorder %s21, 0
      %p109 = por %p107, %p108
      %s111 = sadd.s32 %s110, 1
      %p114 = scmp.eq.s32.totalorder %s15, 1
      %p115 = scmp.ne.s32.totalorder %s110, %s112
      %p116 = scmp.eq.s32.totalorder %s15, 0
      %p117 = por %p115, %p116
      %p118 = scmp.ne.s32.totalorder %s110, %s112
      %p119 = scmp.eq.s32.totalorder %s20, 1
      %p120 = por %p118, %p119
      %p121 = scmp.ne.s32.totalorder %s112, %s113
      %p122 = scmp.eq.s32.totalorder %s20, 0
      %p123 = por %p121, %p122
      %p124 = scmp.ne.s32.totalorder %s112, %s113
      %p125 = scmp.eq.s32.totalorder %s21, 1
      %p126 = por %p124, %p125
      %p128 = scmp.ne.s32.totalorder %s113, %s127
      %p129 = scmp.eq.s32.totalorder %s21, 0
      %p130 = por %p128, %p129
      %s132 = sadd.s32 %s131, 1
      %p135 = scmp.eq.s32.totalorder %s15, 1
      %p136 = scmp.ne.s32.totalorder %s131, %s133
      %p137 = scmp.eq.s32.totalorder %s15, 0
      %p138 = por %p136, %p137
      %p139 = scmp.ne.s32.totalorder %s131, %s133
      %p140 = scmp.eq.s32.totalorder %s20, 1
      %p141 = por %p139, %p140
      %p142 = scmp.ne.s32.totalorder %s133, %s134
      %p143 = scmp.eq.s32.totalorder %s20, 0
      %p144 = por %p142, %p143
      %p145 = scmp.ne.s32.totalorder %s133, %s134
      %p146 = scmp.eq.s32.totalorder %s21, 1
      %p147 = por %p145, %p146
      %p149 = scmp.ne.s32.totalorder %s134, %s148
      %p150 = scmp.eq.s32.totalorder %s21, 0
      %p151 = por %p149, %p150
      %s152 = ssub.s32 %s22, %s34
      %p153 = scmp.eq.s32.totalorder %s152, 0
      %s155 = sadd.s32 %s154, 1
      %s156 = scalar_select %p153, %s154, %s155
      %p159 = pneg %p153
      %p160 = scmp.eq.s32.totalorder %s15, 1
      %p161 = por %p159, %p160
      %p162 = scmp.ne.s32.totalorder %s154, %s157
      %p163 = scmp.eq.s32.totalorder %s15, 0
      %p164 = por %p162, %p163
      %p165 = scmp.ne.s32.totalorder %s154, %s157
      %p166 = scmp.eq.s32.totalorder %s20, 1
      %p167 = por %p165, %p166
      %p168 = scmp.ne.s32.totalorder %s157, %s158
      %p169 = scmp.eq.s32.totalorder %s20, 0
      %p170 = por %p168, %p169
      %p171 = scmp.ne.s32.totalorder %s157, %s158
      %p172 = scmp.eq.s32.totalorder %s21, 1
      %p173 = por %p171, %p172
      %p175 = scmp.ne.s32.totalorder %s158, %s174
      %p176 = scmp.eq.s32.totalorder %s21, 0
      %p177 = por %p175, %p176
      %p178 = scmp.le.s32.totalorder 1, %s15
      %p179 = scmp.lt.s32.totalorder %s15, 3
      %p180 = pnand %p178, %p179
      %p181 = pneg %p180
      // Predicated region
      $region9: #{tpu_custom_call.1} parent=5 // pred_check
        _
      $region10: #{tpu_custom_call.1} parent=5 // pred_check_branch
        %183 = sbr.rel (%p180) target = $region12
      $region11: #{tpu_custom_call.1} parent=5 // pred_region
        %s184 = ssub.s32 %s15, 1
        // Predicated region
        $region13: #{tpu_custom_call.1} parent=11 // pred_check
          %p185 = pneg %p81
        $region14: #{tpu_custom_call.1} parent=11 // pred_check_branch
          %187 = sbr.rel (%p185) target = $region16
        $region15: #{tpu_custom_call.1} parent=11 // pred_region
          %s188 = smul.u32 32, %s25
          %p189 = scmp.lt.s32.totalorder %s188, 31
          %s190 = scalar_select %p189, %s188, 31
          %s191 = smul.addr %s190, 4
          %s192 = scalar_lea.vmem %s1, %s191
          %s193 = smul.u32 32, %s25
        $region16: #{tpu_custom_call.1} parent=11 // pred_fallthru
          _
        // Predicated region
        $region17: #{tpu_custom_call.1} parent=11 // pred_check
          %p194 = pneg %p102
        $region18: #{tpu_custom_call.1} parent=11 // pred_check_branch
          %196 = sbr.rel (%p194) target = $region20
        $region19: #{tpu_custom_call.1} parent=11 // pred_region
          _
        $region20: #{tpu_custom_call.1} parent=11 // pred_fallthru
          _
        // Predicated region
        $region21: #{tpu_custom_call.1} parent=11 // pred_check
          %p197 = pneg %p123
        $region22: #{tpu_custom_call.1} parent=11 // pred_check_branch
          %199 = sbr.rel (%p197) target = $region24
        $region23: #{tpu_custom_call.1} parent=11 // pred_region
          _
        $region24: #{tpu_custom_call.1} parent=11 // pred_fallthru
          _
        // Predicated region
        $region25: #{tpu_custom_call.1} parent=11 // pred_check
          %p200 = pneg %p144
        $region26: #{tpu_custom_call.1} parent=11 // pred_check_branch
          %202 = sbr.rel (%p200) target = $region28
        $region27: #{tpu_custom_call.1} parent=11 // pred_region
          %s204 = ssub.s32 1024, 1024
          %205 = vsyncadd [#allocation4], %s204
          %s206 = sshll.u32 [#allocation3], 4
          %s207 = int_to_ptr.vmem [resolvable:$true] %s206
          %212 = dma.hbm_to_vmem [thread:$0]  %s4, 1024, %s207, [#allocation4], 64, 64, 4
        $region28: #{tpu_custom_call.1} parent=11 // pred_fallthru
          _
      $region12: #{tpu_custom_call.1} parent=5 // pred_fallthru
        _
      %p213 = scmp.lt.s32.totalorder %s15, 2
      // Predicated region
      $region29: #{tpu_custom_call.1} parent=5 // pred_check
        %p214 = pneg %p213
      $region30: #{tpu_custom_call.1} parent=5 // pred_check_branch
        %216 = sbr.rel (%p214) target = $region32
      $region31: #{tpu_custom_call.1} parent=5 // pred_region
        // Predicated region
        $region33: #{tpu_custom_call.1} parent=31 // pred_check
          %p217 = pneg %p49
        $region34: #{tpu_custom_call.1} parent=31 // pred_check_branch
          %219 = sbr.rel (%p217) target = $region36
        $region35: #{tpu_custom_call.1} parent=31 // pred_region
          %s220 = smul.u32 4, %s22
          %s221 = smul.u32 2, %s23
          %p222 = scmp.lt.s32.totalorder %s220, 7
          %s223 = scalar_select %p222, %s220, 7
          %p224 = scmp.lt.s32.totalorder %s221, 1
          %s225 = scalar_select %p224, %s221, 1
          %s226 = smul.addr %s223, 2
          %s227 = sadd.s32 %s225, %s226
          %s228 = smul.addr %s227, 8
          %s229 = scalar_lea.vmem %s0, %s228
          %s230 = smul.u32 4, %s22
          %s231 = smul.u32 2, %s23
        $region36: #{tpu_custom_call.1} parent=31 // pred_fallthru
          _
      $region32: #{tpu_custom_call.1} parent=5 // pred_fallthru
        _
      %p232 = scmp.le.s32.totalorder 1, %s15
      %p233 = scmp.lt.s32.totalorder %s15, 3
      %p234 = pnand %p232, %p233
      %p235 = pneg %p234
      // Predicated region
      $region37: #{tpu_custom_call.1} parent=5 // pred_check
        _
      $region38: #{tpu_custom_call.1} parent=5 // pred_check_branch
        %237 = sbr.rel (%p234) target = $region40
      $region39: #{tpu_custom_call.1} parent=5 // pred_region
        %s238 = ssub.s32 %s15, 1
        // Predicated region
        $region41: #{tpu_custom_call.1} parent=39 // pred_check
          %p239 = pneg %p144
        $region42: #{tpu_custom_call.1} parent=39 // pred_check_branch
          %241 = sbr.rel (%p239) target = $region44
        $region43: #{tpu_custom_call.1} parent=39 // pred_region
          %242 = dma.done [#allocation4], 1024
        $region44: #{tpu_custom_call.1} parent=39 // pred_fallthru
          _
        %s243 = smul.u32 4, %s24
        %s244 = smul.u32 2, %s25
        %p245 = scmp.lt.s32.totalorder %s243, 7
        %s246 = scalar_select %p245, %s243, 7
        %p247 = scmp.lt.s32.totalorder %s244, 1
        %s248 = scalar_select %p247, %s244, 1
        %s249 = smul.addr %s246, 2
        %s250 = sadd.s32 %s248, %s249
        %s251 = smul.addr %s250, 8
        %s252 = scalar_lea.vmem %s0, %s251
        %p253 = pneg %p55
        %p254 = pneg %p52
        %s255 = smul.u32 32, %s25
        %p256 = scmp.lt.s32.totalorder %s255, 31
        %s257 = scalar_select %p256, %s255, 31
        %s258 = smul.addr %s257, 4
        %s259 = scalar_lea.vmem %s1, %s258
        %p260 = pneg %p81
        %p261 = pneg %p78
        %p262 = pneg %p102
        %p263 = pneg %p99
        %p264 = pneg %p123
        %p265 = pneg %p120
        %p266 = pneg %p144
        %p267 = pneg %p141
        %p268 = pneg %p170
        %p269 = pneg %p167
        %s270 = sand.u32 %s157, 1
        %s271 = scalar_lea.sflag [#allocation5], %s270
        %s272 = sand.u32 %s157, 1
        %s273 = smul.addr %s272, 64
        %s274 = scalar_lea.vmem [#allocation6], %s273
        %s275 = smul.u32 4, %s24
        %s276 = smul.u32 2, %s25
        %p277 = scmp.lt.s32.totalorder %s275, 7
        %s278 = scalar_select %p277, %s275, 7
        %p279 = scmp.lt.s32.totalorder %s276, 1
        %s280 = scalar_select %p279, %s276, 1
        %s281 = smul.addr %s278, 2
        %s282 = sadd.s32 %s280, %s281
        %s283 = smul.addr %s282, 8
        %s284 = scalar_lea.vmem %s0, %s283
        %s285 = smul.u32 4, %s24
        %s286 = smul.u32 2, %s25
        %s287 = smul.u32 32, %s25
        %p288 = scmp.lt.s32.totalorder %s287, 31
        %s289 = scalar_select %p288, %s287, 31
        %s290 = smul.addr %s289, 4
        %s291 = scalar_lea.vmem %s1, %s290
        %s292 = smul.u32 32, %s25
        %s293 = smul.u32 16, %s24
        %p295 = scmp.eq.s32.totalorder %s25, 0
        // Predicated region
        $region45: #{tpu_custom_call.1} parent=39 // pred_check
          %p296 = pneg %p295
        $region46: #{tpu_custom_call.1} parent=39 // pred_check_branch
          %298 = sbr.rel (%p296) target = $region48
        $region47: #{tpu_custom_call.1} parent=39 // pred_region
          %299 = vst [vmem:[#allocation2] sm:$0xff] 0.0
          %300 = vst [vmem:[#allocation2 + $0x8] sm:$0xff] 0.0
          %301 = vst [vmem:[#allocation2 + $0x10] sm:$0xff] 0.0
          %302 = vst [vmem:[#allocation2 + $0x18] sm:$0xff] 0.0
          %303 = vst [vmem:[#allocation2 + $0x20] sm:$0xff] 0.0
          %304 = vst [vmem:[#allocation2 + $0x28] sm:$0xff] 0.0
          %305 = vst [vmem:[#allocation2 + $0x30] sm:$0xff] 0.0
          %306 = vst [vmem:[#allocation2 + $0x38] sm:$0xff] 0.0
          %307 = vst [vmem:[#allocation2 + $0x40] sm:$0xff] 0.0
          %308 = vst [vmem:[#allocation2 + $0x48] sm:$0xff] 0.0
          %309 = vst [vmem:[#allocation2 + $0x50] sm:$0xff] 0.0
          %310 = vst [vmem:[#allocation2 + $0x58] sm:$0xff] 0.0
          %311 = vst [vmem:[#allocation2 + $0x60] sm:$0xff] 0.0
          %312 = vst [vmem:[#allocation2 + $0x68] sm:$0xff] 0.0
          %313 = vst [vmem:[#allocation2 + $0x70] sm:$0xff] 0.0
          %314 = vst [vmem:[#allocation2 + $0x78] sm:$0xff] 0.0
        $region48: #{tpu_custom_call.1} parent=39 // pred_fallthru
          _
        %v315 = vld [vmem:[%s291] sm:$0xf]
        %v316 = vld [vmem:[%s291 + $0x4] sm:$0xf]
        %v317 = vld [vmem:[%s291 + $0x8] sm:$0xf]
        %v318 = vld [vmem:[%s291 + $0xc] sm:$0xf]
        %v319 = vld [vmem:[%s291 + $0x10] sm:$0xf]
        %v320 = vld [vmem:[%s291 + $0x14] sm:$0xf]
        %v321 = vld [vmem:[%s291 + $0x18] sm:$0xf]
        %v322 = vld [vmem:[%s291 + $0x1c] sm:$0xf]
        %v323 = vld [vmem:[%s291 + $0x20] sm:$0xf]
        %v324 = vld [vmem:[%s291 + $0x24] sm:$0xf]
        %v325 = vld [vmem:[%s291 + $0x28] sm:$0xf]
        %v326 = vld [vmem:[%s291 + $0x2c] sm:$0xf]
        %v327 = vld [vmem:[%s291 + $0x30] sm:$0xf]
        %v328 = vld [vmem:[%s291 + $0x34] sm:$0xf]
        %v329 = vld [vmem:[%s291 + $0x38] sm:$0xf]
        %v330 = vld [vmem:[%s291 + $0x3c] sm:$0xf]
        %v331 = vld [vmem:[%s291 + $0x40] sm:$0xf]
        %v332 = vld [vmem:[%s291 + $0x44] sm:$0xf]
        %v333 = vld [vmem:[%s291 + $0x48] sm:$0xf]
        %v334 = vld [vmem:[%s291 + $0x4c] sm:$0xf]
        %v335 = vld [vmem:[%s291 + $0x50] sm:$0xf]
        %v336 = vld [vmem:[%s291 + $0x54] sm:$0xf]
        %v337 = vld [vmem:[%s291 + $0x58] sm:$0xf]
        %v338 = vld [vmem:[%s291 + $0x5c] sm:$0xf]
        %v339 = vld [vmem:[%s291 + $0x60] sm:$0xf]
        %v340 = vld [vmem:[%s291 + $0x64] sm:$0xf]
        %v341 = vld [vmem:[%s291 + $0x68] sm:$0xf]
        %v342 = vld [vmem:[%s291 + $0x6c] sm:$0xf]
        %v343 = vld [vmem:[%s291 + $0x70] sm:$0xf]
        %v344 = vld [vmem:[%s291 + $0x74] sm:$0xf]
        %v345 = vld [vmem:[%s291 + $0x78] sm:$0xf]
        %v346 = vld [vmem:[%s291 + $0x7c] sm:$0xf]
        %v347 = vld [vmem:[%s2] sm:$0xf]
        %v348 = vld [vmem:[%s2 + $0x4] sm:$0xf]
        %v381 = vunpack.c.l.b16 %v315
        %v382 = vunpack.c.l.b16 %v316
        %v383 = vunpack.c.l.b16 %v317
        %v384 = vunpack.c.l.b16 %v318
        %v385 = vunpack.c.l.b16 %v319
        %v386 = vunpack.c.l.b16 %v320
        %v387 = vunpack.c.l.b16 %v321
        %v388 = vunpack.c.l.b16 %v322
        %v389 = vunpack.c.l.b16 %v323
        %v390 = vunpack.c.l.b16 %v324
        %v391 = vunpack.c.l.b16 %v325
        %v392 = vunpack.c.l.b16 %v326
        %v393 = vunpack.c.l.b16 %v327
        %v394 = vunpack.c.l.b16 %v328
        %v395 = vunpack.c.l.b16 %v329
        %v396 = vunpack.c.l.b16 %v330
        %v397 = vunpack.c.l.b16 %v331
        %v398 = vunpack.c.l.b16 %v332
        %v399 = vunpack.c.l.b16 %v333
        %v400 = vunpack.c.l.b16 %v334
        %v401 = vunpack.c.l.b16 %v335
        %v402 = vunpack.c.l.b16 %v336
        %v403 = vunpack.c.l.b16 %v337
        %v404 = vunpack.c.l.b16 %v338
        %v405 = vunpack.c.l.b16 %v339
        %v406 = vunpack.c.l.b16 %v340
        %v407 = vunpack.c.l.b16 %v341
        %v408 = vunpack.c.l.b16 %v342
        %v409 = vunpack.c.l.b16 %v343
        %v410 = vunpack.c.l.b16 %v344
        %v411 = vunpack.c.l.b16 %v345
        %v412 = vunpack.c.l.b16 %v346
        %v413 = vpack.c.b16 %v382, %v381
        %v414 = vpack.c.b16 %v384, %v383
        %v415 = vpack.c.b16 %v386, %v385
        %v416 = vpack.c.b16 %v388, %v387
        %v417 = vpack.c.b16 %v390, %v389
        %v418 = vpack.c.b16 %v392, %v391
        %v419 = vpack.c.b16 %v394, %v393
        %v420 = vpack.c.b16 %v396, %v395
        %v421 = vpack.c.b16 %v398, %v397
        %v422 = vpack.c.b16 %v400, %v399
        %v423 = vpack.c.b16 %v402, %v401
        %v424 = vpack.c.b16 %v404, %v403
        %v425 = vpack.c.b16 %v406, %v405
        %v426 = vpack.c.b16 %v408, %v407
        %v427 = vpack.c.b16 %v410, %v409
        %v428 = vpack.c.b16 %v412, %v411
        %v431 = vunpack.c.l.b16 %v347
        %v432 = vunpack.c.l.b16 %v348
        %v433 = vpack.c.b16 %v432, %v431
        %vm435 = vcmask 130048
        %v437 = vsel %vm435, %v413, 0
        %v440 = vsel %vm435, %v414, 0
        %v443 = vsel %vm435, %v415, 0
        %v446 = vsel %vm435, %v416, 0
        %v449 = vsel %vm435, %v417, 0
        %v452 = vsel %vm435, %v418, 0
        %v455 = vsel %vm435, %v419, 0
        %v458 = vsel %vm435, %v420, 0
        %v461 = vsel %vm435, %v421, 0
        %v464 = vsel %vm435, %v422, 0
        %v467 = vsel %vm435, %v423, 0
        %v470 = vsel %vm435, %v424, 0
        %v473 = vsel %vm435, %v425, 0
        %v476 = vsel %vm435, %v426, 0
        %v479 = vsel %vm435, %v427, 0
        %v482 = vsel %vm435, %v428, 0
        %484 = vmatprep.subr.bf16.mxu0 0
        %485 = vmatpush1.bf16.msra.mxu0 %v433
        %486 = vmatprep.subr.bf16.mxu0 0
        %487 = vmatpush1.bf16.msra.mxu0 0
        %488 = vmatprep.subr.bf16.mxu0 0
        %489 = vmatpush1.bf16.msra.mxu0 0
        %490 = vmatprep.subr.bf16.mxu0 0
        %491 = vmatpush1.bf16.msra.mxu0 0
        %492 = vmatprep.subr.bf16.mxu0 0
        %493 = vmatpush1.bf16.msra.mxu0 0
        %494 = vmatprep.subr.bf16.mxu0 0
        %495 = vmatpush1.bf16.msra.mxu0 0
        %496 = vmatprep.subr.bf16.mxu0 0
        %497 = vmatpush1.bf16.msra.mxu0 0
        %498 = vmatprep.subr.bf16.mxu0 0
        %499 = vmatpush1.bf16.msra.mxu0 0
        %500 = vmatprep.subr.bf16.mxu0 0
        %501 = vmatpush1.bf16.msra.mxu0 0
        %502 = vmatprep.subr.bf16.mxu0 0
        %503 = vmatpush1.bf16.msra.mxu0 0
        %504 = vmatprep.subr.bf16.mxu0 0
        %505 = vmatpush1.bf16.msra.mxu0 0
        %506 = vmatprep.subr.bf16.mxu0 0
        %507 = vmatpush1.bf16.msra.mxu0 0
        %508 = vmatprep.subr.bf16.mxu0 0
        %509 = vmatpush1.bf16.msra.mxu0 0
        %510 = vmatprep.subr.bf16.mxu0 0
        %511 = vmatpush1.bf16.msra.mxu0 0
        %512 = vmatprep.subr.bf16.mxu0 0
        %513 = vmatpush1.bf16.msra.mxu0 0
        %514 = vmatprep.subr.bf16.mxu0 0
        %515 = vmatpush1.bf16.msra.mxu0 0
        %516 = vmatprep.mubr.bf16.mxu0 0
        %517 = vmatmul.mubr.bf16.gmra.mrb[0].mxu0 %v437
        %v518 = vpop.f32.mrb[0].mxu0
        %v519 = vadd.f32 0.0, %v518
        %v520 = vpop.f32.mrb[0].mxu0
        %v521 = vpop.f32.mrb[0].mxu0
        %v522 = vadd.f32 0.0, %v521
        %v523 = vpop.f32.mrb[0].mxu0
        %524 = vmatprep.mubr.bf16.mxu0 0
        %525 = vmatmul.mubr.bf16.gmra.mrb[0].mxu0 %v440
        %v526 = vpop.f32.mrb[0].mxu0
        %v527 = vadd.f32 0.0, %v526
        %v528 = vpop.f32.mrb[0].mxu0
        %v529 = vpop.f32.mrb[0].mxu0
        %v530 = vadd.f32 0.0, %v529
        %v531 = vpop.f32.mrb[0].mxu0
        %532 = vmatprep.mubr.bf16.mxu0 0
        %533 = vmatmul.mubr.bf16.gmra.mrb[0].mxu0 %v443
        %v534 = vpop.f32.mrb[0].mxu0
        %v535 = vadd.f32 0.0, %v534
        %v536 = vpop.f32.mrb[0].mxu0
        %v537 = vpop.f32.mrb[0].mxu0
        %v538 = vadd.f32 0.0, %v537
        %v539 = vpop.f32.mrb[0].mxu0
        %540 = vmatprep.mubr.bf16.mxu0 0
        %541 = vmatmul.mubr.bf16.gmra.mrb[0].mxu0 %v446
        %v542 = vpop.f32.mrb[0].mxu0
        %v543 = vadd.f32 0.0, %v542
        %v544 = vpop.f32.mrb[0].mxu0
        %v545 = vpop.f32.mrb[0].mxu0
        %v546 = vadd.f32 0.0, %v545
        %v547 = vpop.f32.mrb[0].mxu0
        %548 = vmatprep.mubr.bf16.mxu0 0
        %549 = vmatmul.mubr.bf16.gmra.mrb[0].mxu0 %v449
        %v550 = vpop.f32.mrb[0].mxu0
        %v551 = vadd.f32 0.0, %v550
        %v552 = vpop.f32.mrb[0].mxu0
        %v553 = vpop.f32.mrb[0].mxu0
        %v554 = vadd.f32 0.0, %v553
        %v555 = vpop.f32.mrb[0].mxu0
        %556 = vmatprep.mubr.bf16.mxu0 0
        %557 = vmatmul.mubr.bf16.gmra.mrb[0].mxu0 %v452
        %v558 = vpop.f32.mrb[0].mxu0
        %v559 = vadd.f32 0.0, %v558
        %v560 = vpop.f32.mrb[0].mxu0
        %v561 = vpop.f32.mrb[0].mxu0
        %v562 = vadd.f32 0.0, %v561
        %v563 = vpop.f32.mrb[0].mxu0
        %564 = vmatprep.mubr.bf16.mxu0 0
        %565 = vmatmul.mubr.bf16.gmra.mrb[0].mxu0 %v455
        %v566 = vpop.f32.mrb[0].mxu0
        %v567 = vadd.f32 0.0, %v566
        %v568 = vpop.f32.mrb[0].mxu0
        %v569 = vpop.f32.mrb[0].mxu0
        %v570 = vadd.f32 0.0, %v569
        %v571 = vpop.f32.mrb[0].mxu0
        %572 = vmatprep.mubr.bf16.mxu0 0
        %573 = vmatmul.mubr.bf16.gmra.mrb[0].mxu0 %v458
        %v574 = vpop.f32.mrb[0].mxu0
        %v575 = vadd.f32 0.0, %v574
        %v576 = vpop.f32.mrb[0].mxu0
        %v577 = vpop.f32.mrb[0].mxu0
        %v578 = vadd.f32 0.0, %v577
        %v579 = vpop.f32.mrb[0].mxu0
        %580 = vmatprep.mubr.bf16.mxu0 0
        %581 = vmatmul.mubr.bf16.gmra.mrb[0].mxu0 %v461
        %v582 = vpop.f32.mrb[0].mxu0
        %v583 = vadd.f32 0.0, %v582
        %v584 = vpop.f32.mrb[0].mxu0
        %v585 = vpop.f32.mrb[0].mxu0
        %v586 = vadd.f32 0.0, %v585
        %v587 = vpop.f32.mrb[0].mxu0
        %588 = vmatprep.mubr.bf16.mxu0 0
        %589 = vmatmul.mubr.bf16.gmra.mrb[0].mxu0 %v464
        %v590 = vpop.f32.mrb[0].mxu0
        %v591 = vadd.f32 0.0, %v590
        %v592 = vpop.f32.mrb[0].mxu0
        %v593 = vpop.f32.mrb[0].mxu0
        %v594 = vadd.f32 0.0, %v593
        %v595 = vpop.f32.mrb[0].mxu0
        %596 = vmatprep.mubr.bf16.mxu0 0
        %597 = vmatmul.mubr.bf16.gmra.mrb[0].mxu0 %v467
        %v598 = vpop.f32.mrb[0].mxu0
        %v599 = vadd.f32 0.0, %v598
        %v600 = vpop.f32.mrb[0].mxu0
        %v601 = vpop.f32.mrb[0].mxu0
        %v602 = vadd.f32 0.0, %v601
        %v603 = vpop.f32.mrb[0].mxu0
        %604 = vmatprep.mubr.bf16.mxu0 0
        %605 = vmatmul.mubr.bf16.gmra.mrb[0].mxu0 %v470
        %v606 = vpop.f32.mrb[0].mxu0
        %v607 = vadd.f32 0.0, %v606
        %v608 = vpop.f32.mrb[0].mxu0
        %v609 = vpop.f32.mrb[0].mxu0
        %v610 = vadd.f32 0.0, %v609
        %v611 = vpop.f32.mrb[0].mxu0
        %612 = vmatprep.mubr.bf16.mxu0 0
        %613 = vmatmul.mubr.bf16.gmra.mrb[0].mxu0 %v473
        %v614 = vpop.f32.mrb[0].mxu0
        %v615 = vadd.f32 0.0, %v614
        %v616 = vpop.f32.mrb[0].mxu0
        %v617 = vpop.f32.mrb[0].mxu0
        %v618 = vadd.f32 0.0, %v617
        %v619 = vpop.f32.mrb[0].mxu0
        %620 = vmatprep.mubr.bf16.mxu0 0
        %621 = vmatmul.mubr.bf16.gmra.mrb[0].mxu0 %v476
        %v622 = vpop.f32.mrb[0].mxu0
        %v623 = vadd.f32 0.0, %v622
        %v624 = vpop.f32.mrb[0].mxu0
        %v625 = vpop.f32.mrb[0].mxu0
        %v626 = vadd.f32 0.0, %v625
        %v627 = vpop.f32.mrb[0].mxu0
        %628 = vmatprep.mubr.bf16.mxu0 0
        %629 = vmatmul.mubr.bf16.gmra.mrb[0].mxu0 %v479
        %v630 = vpop.f32.mrb[0].mxu0
        %v631 = vadd.f32 0.0, %v630
        %v632 = vpop.f32.mrb[0].mxu0
        %v633 = vpop.f32.mrb[0].mxu0
        %v634 = vadd.f32 0.0, %v633
        %v635 = vpop.f32.mrb[0].mxu0
        %636 = vmatprep.mubr.bf16.mxu0 0
        %637 = vmatmul.mubr.bf16.gmra.mrb[0].mxu0 %v482
        %v638 = vpop.f32.mrb[0].mxu0
        %v639 = vadd.f32 0.0, %v638
        %v640 = vpop.f32.mrb[0].mxu0
        %v641 = vpop.f32.mrb[0].mxu0
        %v642 = vadd.f32 0.0, %v641
        %v643 = vpop.f32.mrb[0].mxu0
        %644 = vdwg.mxu0
        %v645 = vld [vmem:[%s284] sm:$0xff]
        %v646 = vld [vmem:[%s284 + $0x8] sm:$0xff]
        %v647 = vld [vmem:[%s284 + $0x10] sm:$0xff]
        %v648 = vld [vmem:[%s284 + $0x18] sm:$0xff]
        %v649 = vld [vmem:[%s284 + $0x20] sm:$0xff]
        %v650 = vld [vmem:[%s284 + $0x28] sm:$0xff]
        %v651 = vld [vmem:[%s284 + $0x30] sm:$0xff]
        %v652 = vld [vmem:[%s284 + $0x38] sm:$0xff]
        %v653 = vunpack.c.l.s8.bf16 %v645
        %v654 = vunpack.c.l.s8.bf16 %v646
        %v655 = vunpack.c.h.s8.bf16 %v645
        %v656 = vunpack.c.h.s8.bf16 %v646
        %v657 = vunpack.c.l.s8.bf16 %v647
        %v658 = vunpack.c.l.s8.bf16 %v648
        %v659 = vunpack.c.h.s8.bf16 %v647
        %v660 = vunpack.c.h.s8.bf16 %v648
        %v661 = vunpack.c.l.s8.bf16 %v649
        %v662 = vunpack.c.l.s8.bf16 %v650
        %v663 = vunpack.c.h.s8.bf16 %v649
        %v664 = vunpack.c.h.s8.bf16 %v650
        %v665 = vunpack.c.l.s8.bf16 %v651
        %v666 = vunpack.c.l.s8.bf16 %v652
        %v667 = vunpack.c.h.s8.bf16 %v651
        %v668 = vunpack.c.h.s8.bf16 %v652
        %v669 = vld [vmem:[#allocation2] sm:$0xff]
        %v670 = vld [vmem:[#allocation2 + $0x8] sm:$0xff]
        %v671 = vld [vmem:[#allocation2 + $0x10] sm:$0xff]
        %v672 = vld [vmem:[#allocation2 + $0x18] sm:$0xff]
        %v673 = vld [vmem:[#allocation2 + $0x20] sm:$0xff]
        %v674 = vld [vmem:[#allocation2 + $0x28] sm:$0xff]
        %v675 = vld [vmem:[#allocation2 + $0x30] sm:$0xff]
        %v676 = vld [vmem:[#allocation2 + $0x38] sm:$0xff]
        %v677 = vld [vmem:[#allocation2 + $0x40] sm:$0xff]
        %v678 = vld [vmem:[#allocation2 + $0x48] sm:$0xff]
        %v679 = vld [vmem:[#allocation2 + $0x50] sm:$0xff]
        %v680 = vld [vmem:[#allocation2 + $0x58] sm:$0xff]
        %v681 = vld [vmem:[#allocation2 + $0x60] sm:$0xff]
        %v682 = vld [vmem:[#allocation2 + $0x68] sm:$0xff]
        %v683 = vld [vmem:[#allocation2 + $0x70] sm:$0xff]
        %v684 = vld [vmem:[#allocation2 + $0x78] sm:$0xff]
        %v685 = vpack.c.bf16 %v522, %v519
        %v686 = vpack.c.bf16 %v530, %v527
        %v687 = vpack.c.bf16 %v538, %v535
        %v688 = vpack.c.bf16 %v546, %v543
        %v689 = vpack.c.bf16 %v554, %v551
        %v690 = vpack.c.bf16 %v562, %v559
        %v691 = vpack.c.bf16 %v570, %v567
        %v692 = vpack.c.bf16 %v578, %v575
        %v693 = vpack.c.bf16 %v586, %v583
        %v694 = vpack.c.bf16 %v594, %v591
        %v695 = vpack.c.bf16 %v602, %v599
        %v696 = vpack.c.bf16 %v610, %v607
        %v697 = vpack.c.bf16 %v618, %v615
        %v698 = vpack.c.bf16 %v626, %v623
        %v699 = vpack.c.bf16 %v634, %v631
        %v700 = vpack.c.bf16 %v642, %v639
        %701 = vmatprep.subr.bf16.mxu0 0
        %702 = vmatpush1.bf16.msra.mxu0 %v685
        %703 = vmatprep.subr.bf16.mxu0 0
        %704 = vmatpush1.bf16.msra.mxu0 %v686
        %705 = vmatprep.subr.bf16.mxu0 0
        %706 = vmatpush1.bf16.msra.mxu0 %v687
        %707 = vmatprep.subr.bf16.mxu0 0
        %708 = vmatpush1.bf16.msra.mxu0 %v688
        %709 = vmatprep.subr.bf16.mxu0 0
        %710 = vmatpush1.bf16.msra.mxu0 %v689
        %711 = vmatprep.subr.bf16.mxu0 0
        %712 = vmatpush1.bf16.msra.mxu0 %v690
        %713 = vmatprep.subr.bf16.mxu0 0
        %714 = vmatpush1.bf16.msra.mxu0 %v691
        %715 = vmatprep.subr.bf16.mxu0 0
        %716 = vmatpush1.bf16.msra.mxu0 %v692
        %717 = vmatprep.subr.bf16.mxu0 0
        %718 = vmatpush1.bf16.msra.mxu0 %v693
        %719 = vmatprep.subr.bf16.mxu0 0
        %720 = vmatpush1.bf16.msra.mxu0 %v694
        %721 = vmatprep.subr.bf16.mxu0 0
        %722 = vmatpush1.bf16.msra.mxu0 %v695
        %723 = vmatprep.subr.bf16.mxu0 0
        %724 = vmatpush1.bf16.msra.mxu0 %v696
        %725 = vmatprep.subr.bf16.mxu0 0
        %726 = vmatpush1.bf16.msra.mxu0 %v697
        %727 = vmatprep.subr.bf16.mxu0 0
        %728 = vmatpush1.bf16.msra.mxu0 %v698
        %729 = vmatprep.subr.bf16.mxu0 0
        %730 = vmatpush1.bf16.msra.mxu0 %v699
        %731 = vmatprep.subr.bf16.mxu0 0
        %732 = vmatpush1.bf16.msra.mxu0 %v700
        %733 = vmatprep.mubr.bf16.mxu0 %v654
        %734 = vmatmul.mubr.bf16.gmra.mrb[0].mxu0 %v653
        %v735 = vpop.f32.mrb[0].mxu0
        %v736 = vadd.f32 0.0, %v735
        %v737 = vpop.f32.mrb[0].mxu0
        %v738 = vpop.f32.mrb[0].mxu0
        %v739 = vadd.f32 0.0, %v738
        %v740 = vpop.f32.mrb[0].mxu0
        %741 = vmatprep.mubr.bf16.mxu0 %v656
        %742 = vmatmul.mubr.bf16.gmra.mrb[0].mxu0 %v655
        %v743 = vpop.f32.mrb[0].mxu0
        %v744 = vadd.f32 0.0, %v743
        %v745 = vpop.f32.mrb[0].mxu0
        %v746 = vpop.f32.mrb[0].mxu0
        %v747 = vadd.f32 0.0, %v746
        %v748 = vpop.f32.mrb[0].mxu0
        %749 = vmatprep.mubr.bf16.mxu0 %v658
        %750 = vmatmul.mubr.bf16.gmra.mrb[0].mxu0 %v657
        %v751 = vpop.f32.mrb[0].mxu0
        %v752 = vadd.f32 0.0, %v751
        %v753 = vpop.f32.mrb[0].mxu0
        %v754 = vpop.f32.mrb[0].mxu0
        %v755 = vadd.f32 0.0, %v754
        %v756 = vpop.f32.mrb[0].mxu0
        %757 = vmatprep.mubr.bf16.mxu0 %v660
        %758 = vmatmul.mubr.bf16.gmra.mrb[0].mxu0 %v659
        %v759 = vpop.f32.mrb[0].mxu0
        %v760 = vadd.f32 0.0, %v759
        %v761 = vpop.f32.mrb[0].mxu0
        %v762 = vpop.f32.mrb[0].mxu0
        %v763 = vadd.f32 0.0, %v762
        %v764 = vpop.f32.mrb[0].mxu0
        %765 = vmatprep.mubr.bf16.mxu0 %v662
        %766 = vmatmul.mubr.bf16.gmra.mrb[0].mxu0 %v661
        %v767 = vpop.f32.mrb[0].mxu0
        %v768 = vadd.f32 0.0, %v767
        %v769 = vpop.f32.mrb[0].mxu0
        %v770 = vpop.f32.mrb[0].mxu0
        %v771 = vadd.f32 0.0, %v770
        %v772 = vpop.f32.mrb[0].mxu0
        %773 = vmatprep.mubr.bf16.mxu0 %v664
        %774 = vmatmul.mubr.bf16.gmra.mrb[0].mxu0 %v663
        %v775 = vpop.f32.mrb[0].mxu0
        %v776 = vadd.f32 0.0, %v775
        %v777 = vpop.f32.mrb[0].mxu0
        %v778 = vpop.f32.mrb[0].mxu0
        %v779 = vadd.f32 0.0, %v778
        %v780 = vpop.f32.mrb[0].mxu0
        %781 = vmatprep.mubr.bf16.mxu0 %v666
        %782 = vmatmul.mubr.bf16.gmra.mrb[0].mxu0 %v665
        %v783 = vpop.f32.mrb[0].mxu0
        %v784 = vadd.f32 0.0, %v783
        %v785 = vpop.f32.mrb[0].mxu0
        %v786 = vpop.f32.mrb[0].mxu0
        %v787 = vadd.f32 0.0, %v786
        %v788 = vpop.f32.mrb[0].mxu0
        %789 = vmatprep.mubr.bf16.mxu0 %v668
        %790 = vmatmul.mubr.bf16.gmra.mrb[0].mxu0 %v667
        %v791 = vpop.f32.mrb[0].mxu0
        %v792 = vadd.f32 0.0, %v791
        %v793 = vpop.f32.mrb[0].mxu0
        %v794 = vpop.f32.mrb[0].mxu0
        %v795 = vadd.f32 0.0, %v794
        %v796 = vpop.f32.mrb[0].mxu0
        %797 = vdwg.mxu0
        %v798 = vadd.f32 %v669, %v736
        %v799 = vadd.f32 %v670, %v739
        %v800 = vadd.f32 %v671, %v744
        %v801 = vadd.f32 %v672, %v747
        %v802 = vadd.f32 %v673, %v752
        %v803 = vadd.f32 %v674, %v755
        %v804 = vadd.f32 %v675, %v760
        %v805 = vadd.f32 %v676, %v763
        %v806 = vadd.f32 %v677, %v768
        %v807 = vadd.f32 %v678, %v771
        %v808 = vadd.f32 %v679, %v776
        %v809 = vadd.f32 %v680, %v779
        %v810 = vadd.f32 %v681, %v784
        %v811 = vadd.f32 %v682, %v787
        %v812 = vadd.f32 %v683, %v792
        %v813 = vadd.f32 %v684, %v795
        %814 = vst [vmem:[#allocation2] sm:$0xff] %v798
        %815 = vst [vmem:[#allocation2 + $0x8] sm:$0xff] %v799
        %816 = vst [vmem:[#allocation2 + $0x10] sm:$0xff] %v800
        %817 = vst [vmem:[#allocation2 + $0x18] sm:$0xff] %v801
        %818 = vst [vmem:[#allocation2 + $0x20] sm:$0xff] %v802
        %819 = vst [vmem:[#allocation2 + $0x28] sm:$0xff] %v803
        %820 = vst [vmem:[#allocation2 + $0x30] sm:$0xff] %v804
        %821 = vst [vmem:[#allocation2 + $0x38] sm:$0xff] %v805
        %822 = vst [vmem:[#allocation2 + $0x40] sm:$0xff] %v806
        %823 = vst [vmem:[#allocation2 + $0x48] sm:$0xff] %v807
        %824 = vst [vmem:[#allocation2 + $0x50] sm:$0xff] %v808
        %825 = vst [vmem:[#allocation2 + $0x58] sm:$0xff] %v809
        %826 = vst [vmem:[#allocation2 + $0x60] sm:$0xff] %v810
        %827 = vst [vmem:[#allocation2 + $0x68] sm:$0xff] %v811
        %828 = vst [vmem:[#allocation2 + $0x70] sm:$0xff] %v812
        %829 = vst [vmem:[#allocation2 + $0x78] sm:$0xff] %v813
        // Predicated region
        $region49: #{tpu_custom_call.1} parent=39 // pred_check
          %p830 = pneg %p295
        $region50: #{tpu_custom_call.1} parent=39 // pred_check_branch
          %832 = sbr.rel (%p830) target = $region52
        $region51: #{tpu_custom_call.1} parent=39 // pred_region
          %v833 = vld [vmem:[#allocation2] sm:$0xff]
          %v834 = vld [vmem:[#allocation2 + $0x8] sm:$0xff]
          %v835 = vld [vmem:[#allocation2 + $0x10] sm:$0xff]
          %v836 = vld [vmem:[#allocation2 + $0x18] sm:$0xff]
          %v837 = vld [vmem:[#allocation2 + $0x20] sm:$0xff]
          %v838 = vld [vmem:[#allocation2 + $0x28] sm:$0xff]
          %v839 = vld [vmem:[#allocation2 + $0x30] sm:$0xff]
          %v840 = vld [vmem:[#allocation2 + $0x38] sm:$0xff]
          %v841 = vld [vmem:[#allocation2 + $0x40] sm:$0xff]
          %v842 = vld [vmem:[#allocation2 + $0x48] sm:$0xff]
          %v843 = vld [vmem:[#allocation2 + $0x50] sm:$0xff]
          %v844 = vld [vmem:[#allocation2 + $0x58] sm:$0xff]
          %v845 = vld [vmem:[#allocation2 + $0x60] sm:$0xff]
          %v846 = vld [vmem:[#allocation2 + $0x68] sm:$0xff]
          %v847 = vld [vmem:[#allocation2 + $0x70] sm:$0xff]
          %v848 = vld [vmem:[#allocation2 + $0x78] sm:$0xff]
          %v849 = vmul.f32 %v833, 0.007874016
          %v850 = vmul.f32 %v834, 0.007874016
          %v851 = vmul.f32 %v835, 0.007874016
          %v852 = vmul.f32 %v836, 0.007874016
          %v853 = vmul.f32 %v837, 0.007874016
          %v854 = vmul.f32 %v838, 0.007874016
          %v855 = vmul.f32 %v839, 0.007874016
          %v856 = vmul.f32 %v840, 0.007874016
          %v857 = vmul.f32 %v841, 0.007874016
          %v858 = vmul.f32 %v842, 0.007874016
          %v859 = vmul.f32 %v843, 0.007874016
          %v860 = vmul.f32 %v844, 0.007874016
          %v861 = vmul.f32 %v845, 0.007874016
          %v862 = vmul.f32 %v846, 0.007874016
          %v863 = vmul.f32 %v847, 0.007874016
          %v864 = vmul.f32 %v848, 0.007874016
          %v865 = vld [vmem:[%s3] sm:$0x1]
          %v867 = vlaneseq
          %v868 = vshrl.u32 %v867, 7
          %v869 = vsub.s32 0, %v868
          %v870 = vrot.slane %v865, %v869
          %v872 = vadd.f32 %v849, %v870
          %v873 = vadd.f32 %v850, %v870
          %v874 = vadd.f32 %v851, %v870
          %v875 = vadd.f32 %v852, %v870
          %v876 = vadd.f32 %v853, %v870
          %v877 = vadd.f32 %v854, %v870
          %v878 = vadd.f32 %v855, %v870
          %v879 = vadd.f32 %v856, %v870
          %v880 = vadd.f32 %v857, %v870
          %v881 = vadd.f32 %v858, %v870
          %v882 = vadd.f32 %v859, %v870
          %v883 = vadd.f32 %v860, %v870
          %v884 = vadd.f32 %v861, %v870
          %v885 = vadd.f32 %v862, %v870
          %v886 = vadd.f32 %v863, %v870
          %v887 = vadd.f32 %v864, %v870
          %v888 = vmax.f32 %v872, 0.0
          %v889 = vmax.f32 %v873, 0.0
          %v890 = vmax.f32 %v874, 0.0
          %v891 = vmax.f32 %v875, 0.0
          %v892 = vmax.f32 %v876, 0.0
          %v893 = vmax.f32 %v877, 0.0
          %v894 = vmax.f32 %v878, 0.0
          %v895 = vmax.f32 %v879, 0.0
          %v896 = vmax.f32 %v880, 0.0
          %v897 = vmax.f32 %v881, 0.0
          %v898 = vmax.f32 %v882, 0.0
          %v899 = vmax.f32 %v883, 0.0
          %v900 = vmax.f32 %v884, 0.0
          %v901 = vmax.f32 %v885, 0.0
          %v902 = vmax.f32 %v886, 0.0
          %v903 = vmax.f32 %v887, 0.0
          %v904 = vpack.c.bf16 %v889, %v888
          %v905 = vpack.c.bf16 %v891, %v890
          %v906 = vpack.c.bf16 %v893, %v892
          %v907 = vpack.c.bf16 %v895, %v894
          %v908 = vpack.c.bf16 %v897, %v896
          %v909 = vpack.c.bf16 %v899, %v898
          %v910 = vpack.c.bf16 %v901, %v900
          %v911 = vpack.c.bf16 %v903, %v902
          %v912 = vld [vmem:[#allocation3] sm:$0xf]
          %v913 = vld [vmem:[#allocation3 + $0x4] sm:$0xf]
          %v914 = vld [vmem:[#allocation3 + $0x8] sm:$0xf]
          %v915 = vld [vmem:[#allocation3 + $0xc] sm:$0xf]
          %v916 = vld [vmem:[#allocation3 + $0x10] sm:$0xf]
          %v917 = vld [vmem:[#allocation3 + $0x14] sm:$0xf]
          %v918 = vld [vmem:[#allocation3 + $0x18] sm:$0xf]
          %v919 = vld [vmem:[#allocation3 + $0x1c] sm:$0xf]
          %v920 = vld [vmem:[#allocation3 + $0x20] sm:$0xf]
          %v921 = vld [vmem:[#allocation3 + $0x24] sm:$0xf]
          %v922 = vld [vmem:[#allocation3 + $0x28] sm:$0xf]
          %v923 = vld [vmem:[#allocation3 + $0x2c] sm:$0xf]
          %v924 = vld [vmem:[#allocation3 + $0x30] sm:$0xf]
          %v925 = vld [vmem:[#allocation3 + $0x34] sm:$0xf]
          %v926 = vld [vmem:[#allocation3 + $0x38] sm:$0xf]
          %v927 = vld [vmem:[#allocation3 + $0x3c] sm:$0xf]
          %v944 = vunpack.c.l.b16 %v912
          %v945 = vunpack.c.l.b16 %v913
          %v946 = vunpack.c.l.b16 %v914
          %v947 = vunpack.c.l.b16 %v915
          %v948 = vunpack.c.l.b16 %v916
          %v949 = vunpack.c.l.b16 %v917
          %v950 = vunpack.c.l.b16 %v918
          %v951 = vunpack.c.l.b16 %v919
          %v952 = vunpack.c.l.b16 %v920
          %v953 = vunpack.c.l.b16 %v921
          %v954 = vunpack.c.l.b16 %v922
          %v955 = vunpack.c.l.b16 %v923
          %v956 = vunpack.c.l.b16 %v924
          %v957 = vunpack.c.l.b16 %v925
          %v958 = vunpack.c.l.b16 %v926
          %v959 = vunpack.c.l.b16 %v927
          %v960 = vpack.c.b16 %v945, %v944
          %v961 = vpack.c.b16 %v947, %v946
          %v962 = vpack.c.b16 %v949, %v948
          %v963 = vpack.c.b16 %v951, %v950
          %v964 = vpack.c.b16 %v953, %v952
          %v965 = vpack.c.b16 %v955, %v954
          %v966 = vpack.c.b16 %v957, %v956
          %v967 = vpack.c.b16 %v959, %v958
          %976 = vmatprep.subr.bf16.mxu0 0
          %977 = vmatpush1.bf16.msra.mxu0 %v960
          %978 = vmatprep.subr.bf16.mxu0 0
          %979 = vmatpush1.bf16.msra.mxu0 %v961
          %980 = vmatprep.subr.bf16.mxu0 0
          %981 = vmatpush1.bf16.msra.mxu0 %v962
          %982 = vmatprep.subr.bf16.mxu0 0
          %983 = vmatpush1.bf16.msra.mxu0 %v963
          %984 = vmatprep.subr.bf16.mxu0 0
          %985 = vmatpush1.bf16.msra.mxu0 %v964
          %986 = vmatprep.subr.bf16.mxu0 0
          %987 = vmatpush1.bf16.msra.mxu0 %v965
          %988 = vmatprep.subr.bf16.mxu0 0
          %989 = vmatpush1.bf16.msra.mxu0 %v966
          %990 = vmatprep.subr.bf16.mxu0 0
          %991 = vmatpush1.bf16.msra.mxu0 %v967
          %992 = vmatprep.subr.bf16.mxu0 0
          %993 = vmatpush1.bf16.msra.mxu0 0
          %994 = vmatprep.subr.bf16.mxu0 0
          %995 = vmatpush1.bf16.msra.mxu0 0
          %996 = vmatprep.subr.bf16.mxu0 0
          %997 = vmatpush1.bf16.msra.mxu0 0
          %998 = vmatprep.subr.bf16.mxu0 0
          %999 = vmatpush1.bf16.msra.mxu0 0
          %1000 = vmatprep.subr.bf16.mxu0 0
          %1001 = vmatpush1.bf16.msra.mxu0 0
          %1002 = vmatprep.subr.bf16.mxu0 0
          %1003 = vmatpush1.bf16.msra.mxu0 0
          %1004 = vmatprep.subr.bf16.mxu0 0
          %1005 = vmatpush1.bf16.msra.mxu0 0
          %1006 = vmatprep.subr.bf16.mxu0 0
          %1007 = vmatpush1.bf16.msra.mxu0 0
          %1008 = vmatprep.mubr.bf16.mxu0 0
          %1009 = vmatmul.mubr.bf16.gmra.mrb[0].mxu0 %v904
          %v1010 = vpop.f32.mrb[0].mxu0
          %v1011 = vadd.f32 0.0, %v1010
          %v1012 = vpop.f32.mrb[0].mxu0
          %v1013 = vpop.f32.mrb[0].mxu0
          %v1014 = vadd.f32 0.0, %v1013
          %v1015 = vpop.f32.mrb[0].mxu0
          %1016 = vmatprep.mubr.bf16.mxu0 0
          %1017 = vmatmul.mubr.bf16.gmra.mrb[0].mxu0 %v905
          %v1018 = vpop.f32.mrb[0].mxu0
          %v1019 = vadd.f32 0.0, %v1018
          %v1020 = vpop.f32.mrb[0].mxu0
          %v1021 = vpop.f32.mrb[0].mxu0
          %v1022 = vadd.f32 0.0, %v1021
          %v1023 = vpop.f32.mrb[0].mxu0
          %1024 = vmatprep.mubr.bf16.mxu0 0
          %1025 = vmatmul.mubr.bf16.gmra.mrb[0].mxu0 %v906
          %v1026 = vpop.f32.mrb[0].mxu0
          %v1027 = vadd.f32 0.0, %v1026
          %v1028 = vpop.f32.mrb[0].mxu0
          %v1029 = vpop.f32.mrb[0].mxu0
          %v1030 = vadd.f32 0.0, %v1029
          %v1031 = vpop.f32.mrb[0].mxu0
          %1032 = vmatprep.mubr.bf16.mxu0 0
          %1033 = vmatmul.mubr.bf16.gmra.mrb[0].mxu0 %v907
          %v1034 = vpop.f32.mrb[0].mxu0
          %v1035 = vadd.f32 0.0, %v1034
          %v1036 = vpop.f32.mrb[0].mxu0
          %v1037 = vpop.f32.mrb[0].mxu0
          %v1038 = vadd.f32 0.0, %v1037
          %v1039 = vpop.f32.mrb[0].mxu0
          %1040 = vmatprep.mubr.bf16.mxu0 0
          %1041 = vmatmul.mubr.bf16.gmra.mrb[0].mxu0 %v908
          %v1042 = vpop.f32.mrb[0].mxu0
          %v1043 = vadd.f32 0.0, %v1042
          %v1044 = vpop.f32.mrb[0].mxu0
          %v1045 = vpop.f32.mrb[0].mxu0
          %v1046 = vadd.f32 0.0, %v1045
          %v1047 = vpop.f32.mrb[0].mxu0
          %1048 = vmatprep.mubr.bf16.mxu0 0
          %1049 = vmatmul.mubr.bf16.gmra.mrb[0].mxu0 %v909
          %v1050 = vpop.f32.mrb[0].mxu0
          %v1051 = vadd.f32 0.0, %v1050
          %v1052 = vpop.f32.mrb[0].mxu0
          %v1053 = vpop.f32.mrb[0].mxu0
          %v1054 = vadd.f32 0.0, %v1053
          %v1055 = vpop.f32.mrb[0].mxu0
          %1056 = vmatprep.mubr.bf16.mxu0 0
          %1057 = vmatmul.mubr.bf16.gmra.mrb[0].mxu0 %v910
          %v1058 = vpop.f32.mrb[0].mxu0
          %v1059 = vadd.f32 0.0, %v1058
          %v1060 = vpop.f32.mrb[0].mxu0
          %v1061 = vpop.f32.mrb[0].mxu0
          %v1062 = vadd.f32 0.0, %v1061
          %v1063 = vpop.f32.mrb[0].mxu0
          %1064 = vmatprep.mubr.bf16.mxu0 0
          %1065 = vmatmul.mubr.bf16.gmra.mrb[0].mxu0 %v911
          %v1066 = vpop.f32.mrb[0].mxu0
          %v1067 = vadd.f32 0.0, %v1066
          %v1068 = vpop.f32.mrb[0].mxu0
          %v1069 = vpop.f32.mrb[0].mxu0
          %v1070 = vadd.f32 0.0, %v1069
          %v1071 = vpop.f32.mrb[0].mxu0
          %1072 = vdwg.mxu0
          %v1073 = vpack.c.bf16 %v1014, %v1011
          %v1074 = vpack.c.bf16 %v1022, %v1019
          %v1075 = vpack.c.bf16 %v1030, %v1027
          %v1076 = vpack.c.bf16 %v1038, %v1035
          %v1077 = vpack.c.bf16 %v1046, %v1043
          %v1078 = vpack.c.bf16 %v1054, %v1051
          %v1079 = vpack.c.bf16 %v1062, %v1059
          %v1080 = vpack.c.bf16 %v1070, %v1067
          %v1089 = vunpack.c.l.b16 %v1073
          %v1090 = vunpack.c.h.b16 %v1073
          %v1091 = vunpack.c.l.b16 %v1074
          %v1092 = vunpack.c.h.b16 %v1074
          %v1093 = vunpack.c.l.b16 %v1075
          %v1094 = vunpack.c.h.b16 %v1075
          %v1095 = vunpack.c.l.b16 %v1076
          %v1096 = vunpack.c.h.b16 %v1076
          %v1097 = vunpack.c.l.b16 %v1077
          %v1098 = vunpack.c.h.b16 %v1077
          %v1099 = vunpack.c.l.b16 %v1078
          %v1100 = vunpack.c.h.b16 %v1078
          %v1101 = vunpack.c.l.b16 %v1079
          %v1102 = vunpack.c.h.b16 %v1079
          %v1103 = vunpack.c.l.b16 %v1080
          %v1104 = vunpack.c.h.b16 %v1080
          %v1105 = vpack.c.b16 %v1089, %v1089
          %v1106 = vpack.c.b16 %v1090, %v1090
          %v1107 = vpack.c.b16 %v1091, %v1091
          %v1108 = vpack.c.b16 %v1092, %v1092
          %v1109 = vpack.c.b16 %v1093, %v1093
          %v1110 = vpack.c.b16 %v1094, %v1094
          %v1111 = vpack.c.b16 %v1095, %v1095
          %v1112 = vpack.c.b16 %v1096, %v1096
          %v1113 = vpack.c.b16 %v1097, %v1097
          %v1114 = vpack.c.b16 %v1098, %v1098
          %v1115 = vpack.c.b16 %v1099, %v1099
          %v1116 = vpack.c.b16 %v1100, %v1100
          %v1117 = vpack.c.b16 %v1101, %v1101
          %v1118 = vpack.c.b16 %v1102, %v1102
          %v1119 = vpack.c.b16 %v1103, %v1103
          %v1120 = vpack.c.b16 %v1104, %v1104
          %1137 = vst [vmem:[%s274] sm:$0xf] %v1105
          %1138 = vst [vmem:[%s274 + $0x4] sm:$0xf] %v1106
          %1139 = vst [vmem:[%s274 + $0x8] sm:$0xf] %v1107
          %1140 = vst [vmem:[%s274 + $0xc] sm:$0xf] %v1108
          %1141 = vst [vmem:[%s274 + $0x10] sm:$0xf] %v1109
          %1142 = vst [vmem:[%s274 + $0x14] sm:$0xf] %v1110
          %1143 = vst [vmem:[%s274 + $0x18] sm:$0xf] %v1111
          %1144 = vst [vmem:[%s274 + $0x1c] sm:$0xf] %v1112
          %1145 = vst [vmem:[%s274 + $0x20] sm:$0xf] %v1113
          %1146 = vst [vmem:[%s274 + $0x24] sm:$0xf] %v1114
          %1147 = vst [vmem:[%s274 + $0x28] sm:$0xf] %v1115
          %1148 = vst [vmem:[%s274 + $0x2c] sm:$0xf] %v1116
          %1149 = vst [vmem:[%s274 + $0x30] sm:$0xf] %v1117
          %1150 = vst [vmem:[%s274 + $0x34] sm:$0xf] %v1118
          %1151 = vst [vmem:[%s274 + $0x38] sm:$0xf] %v1119
          %1152 = vst [vmem:[%s274 + $0x3c] sm:$0xf] %v1120
        $region52: #{tpu_custom_call.1} parent=39 // pred_fallthru
          _
        %s1153 = sand.u32 %s157, 1
        %s1154 = scalar_lea.sflag [#allocation5], %s1153
        %s1155 = sand.u32 %s157, 1
        %s1156 = smul.addr %s1155, 64
        %s1157 = scalar_lea.vmem [#allocation6], %s1156
        // Predicated region
        $region53: #{tpu_custom_call.1} parent=39 // pred_check
          %p1158 = pneg %p167
        $region54: #{tpu_custom_call.1} parent=39 // pred_check_branch
          %1160 = sbr.rel (%p1158) target = $region56
        $region55: #{tpu_custom_call.1} parent=39 // pred_region
          %s1161 = smul.u32 16, %s24
          %s1163 = ssub.s32 1024, 1024
          %1164 = vsyncadd %s1154, %s1163
          %s1165 = smul.addr %s1161, 64
          %s1166 = scalar_lea.hbm %s5, %s1165
          %s1167 = sshll.u32 %s1157, 4
          %s1168 = int_to_ptr.vmem [resolvable:$true] %s1167
          %1173 = dma.vmem_to_hbm [thread:$0]  %s1168, 1024, %s1166, %s1154, 64, 64, 4
        $region56: #{tpu_custom_call.1} parent=39 // pred_fallthru
          _
      $region40: #{tpu_custom_call.1} parent=5 // pred_fallthru
        _
      %p1174 = scmp.le.s32.totalorder 2, %s15
      // Predicated region
      $region57: #{tpu_custom_call.1} parent=5 // pred_check
        %p1175 = pneg %p1174
      $region58: #{tpu_custom_call.1} parent=5 // pred_check_branch
        %1177 = sbr.rel (%p1175) target = $region60
      $region59: #{tpu_custom_call.1} parent=5 // pred_region
        %s1178 = ssub.s32 %s15, 2
        // Predicated region
        $region61: #{tpu_custom_call.1} parent=59 // pred_check
          %p1179 = pneg %p173
        $region62: #{tpu_custom_call.1} parent=59 // pred_check_branch
          %1181 = sbr.rel (%p1179) target = $region64
        $region63: #{tpu_custom_call.1} parent=59 // pred_region
          %s1182 = sand.u32 %s158, 1
          %s1183 = scalar_lea.sflag [#allocation5], %s1182
          %s1184 = sand.u32 %s158, 1
          %s1185 = smul.addr %s1184, 64
          %s1186 = scalar_lea.vmem [#allocation6], %s1185
          %1187 = dma.done %s1183, 1024
        $region64: #{tpu_custom_call.1} parent=59 // pred_fallthru
          _
      $region60: #{tpu_custom_call.1} parent=5 // pred_fallthru
        _
    $region6: #{tpu_custom_call.1} parent=1 // loop_footer
      %s19 = sadd.s32 1, %s15
    $region7: #{tpu_custom_call.1} parent=1 // loop_footer_branch
      %14 = sbr.rel target = $region3
    $region8: #{tpu_custom_call.1} parent=1 // loop_exit
      _
    %1188 = vsyncpa [#allocation4], 1
    %s1189 = scalar_lea.sflag [#allocation4], 1
    %1190 = vsyncpa %s1189, 1
    %1191 = vsyncpa [#allocation5], 1
    %s1192 = scalar_lea.sflag [#allocation5], 1
    %1193 = vsyncpa %s1192, 1

</llo_original>
